<compile_context>
chip_gen: v5e
topology: v5e:2x2
jax: 0.10.0
libtpu: 0.0.40
codegen_flags: <defaults>
</compile_context>

<pallas_src>
import functools

import jax
import jax.numpy as jnp
import numpy as np
from jax.experimental import pallas as pl
from jax.experimental.pallas import tpu as pltpu


def _round_up(x, m):
    return (x + m - 1) // m * m


def _conv_kernel(*refs, taps, Wp, m_pad, has_bias):
    """One grid step: dense (stride-1) conv for the nb images in this block.

    x_ref : (nb*Cin, Lext)          zero-padded, row-flattened images (image-major rows)
    w_ref : (K*K, nb*Cout, nb*Cin)  per-tap weight, block-diagonal over the nb images
    b_ref : (nb*Cout, 1)            bias (only present when has_bias)
    o_ref : (nb*Cout, m_pad)        dense conv output, lane-dense, unmasked stores
    """
    if has_bias:
        x_ref, w_ref, b_ref, o_ref = refs
    else:
        x_ref, w_ref, o_ref = refs

    acc = None
    for t, (kh, kw) in enumerate(taps):
        s = kh * Wp + kw                                   # static lane shift
        part = jnp.dot(w_ref[t], x_ref[:, s:s + m_pad],
                       preferred_element_type=jnp.float32)
        acc = part if acc is None else acc + part          # MRB accum on v7x / VPU add elsewhere
    if has_bias:
        acc = acc + b_ref[...]
    o_ref[...] = acc.astype(o_ref.dtype)


def _pick_images_per_block(N, Cin, Cout, K, Lext, m_pad, in_item, out_item, budget):
    """Images folded into one grid step, bounded by a VMEM budget."""
    divisors = [d for d in range(1, N + 1) if N % d == 0]

    def bytes_for(nb):
        # double-buffered in/out blocks + resident (lane-padded) weight
        blocks = 2 * nb * (Cin * Lext * in_item + Cout * m_pad * out_item)
        w = K * K * _round_up(nb * Cout, 8) * _round_up(nb * Cin, 128) * in_item
        return blocks + w

    feasible = [nb for nb in divisors if bytes_for(nb) <= budget] or [1]

    def rank(nb):
        sublane_clean = (nb * Cin) % 8 == 0     # no sublane padding on the input block
        enough_steps = (N // nb) >= 4           # >= 2 pipelined steps per v7x TensorCore
        return (not sublane_clean, not enough_steps, nb)

    return min(feasible, key=rank)


def quant_conv2d_forward(x_nchw, kernel_q, bias=None, *, stride=1, padding=None,
                         images_per_block=None, compute_dtype=jnp.float32,
                         vmem_budget_bytes=24 << 20):
    """Pallas implementation of QuantConv2d.forward.

    x_nchw   : (N, Cin, H, W)     float32
    kernel_q : (Cout, Cin, K, K)  float32
    bias     : optional (Cout,)   float32 (module default: None)
    compute_dtype: set to jnp.bfloat16 on v6e/v7x when bit parity isn't needed.
    """
    N, Cin, H, W = x_nchw.shape
    Cout, Cin_w, K, K2 = kernel_q.shape
    assert Cin == Cin_w and K == K2
    pad = (K // 2) if padding is None else padding

    Hp, Wp = H + 2 * pad, W + 2 * pad
    Ho = (Hp - K) // stride + 1
    Wo = (Wp - K) // stride + 1
    assert Ho > 0 and Wo > 0
    # Wrap-around columns of the row-flattened trick must be cropped:
    assert Wo <= Wp - K + 1, "valid output width must exclude wrapped columns"

    Hd = Hp - K + 1                      # dense (stride-1) output rows
    m_dense = Hd * Wp                    # dense output pixels per image
    m_pad = _round_up(m_dense, 128)      # lane-dense -> unmasked vst
    s_max = (K - 1) * Wp + (K - 1)       # largest tap shift
    Lext = _round_up(max(s_max + m_pad, Hp * Wp), 128)

    in_item = jnp.dtype(compute_dtype).itemsize
    out_item = jnp.dtype(x_nchw.dtype).itemsize

    if images_per_block is None:
        nb = _pick_images_per_block(N, Cin, Cout, K, Lext, m_pad, in_item,
                                    out_item, vmem_budget_bytes)
    else:
        nb = images_per_block
    assert N % nb == 0
    n_steps = N // nb

    # --- wrapper-side prep: pad + flatten only, no activation transpose. ---
    x_p = jnp.pad(x_nchw, ((0, 0), (0, 0), (pad, pad), (pad, pad)))
    x_2d = x_p.reshape(N * Cin, Hp * Wp)
    x_2d = jnp.pad(x_2d, ((0, 0), (0, Lext - Hp * Wp))).astype(compute_dtype)

    # Per-tap weights, replicated block-diagonally over the nb images folded
    # into the sublane axis: W_bd[t, n*Cout+o, m*Cin+c] = (n==m) * w[o, c, kh, kw].
    w_taps = jnp.transpose(kernel_q, (2, 3, 0, 1)).reshape(K * K, Cout, Cin)
    eye = jnp.eye(nb, dtype=kernel_q.dtype)
    w_bd = jnp.einsum('nm,toc->tnomc', eye, w_taps)
    w_bd = w_bd.reshape(K * K, nb * Cout, nb * Cin).astype(compute_dtype)

    has_bias = bias is not None
    inputs = [x_2d, w_bd]
    in_specs = [
        pl.BlockSpec((nb * Cin, Lext), lambda i: (i, 0)),
        pl.BlockSpec((K * K, nb * Cout, nb * Cin), lambda i: (0, 0, 0)),
    ]
    if has_bias:
        b_tiled = jnp.tile(jnp.asarray(bias, jnp.float32).reshape(Cout, 1), (nb, 1))
        inputs.append(b_tiled)
        in_specs.append(pl.BlockSpec((nb * Cout, 1), lambda i: (0, 0)))

    taps = tuple((kh, kw) for kh in range(K) for kw in range(K))
    kernel = functools.partial(_conv_kernel, taps=taps, Wp=Wp, m_pad=m_pad,
                               has_bias=has_bias)

    # Explicit VMEM limit (v5e default scoped limit is only 16 MiB).
    block_bytes = 2 * nb * (Cin * Lext * in_item + Cout * m_pad * out_item)
    w_bytes = K * K * _round_up(nb * Cout, 8) * _round_up(nb * Cin, 128) * in_item
    vmem_limit = int(max(block_bytes + w_bytes + (2 << 20), 32 << 20))

    cost = pl.CostEstimate(
        flops=int(2 * n_steps * len(taps) * (nb * Cout) * (nb * Cin) * m_pad),
        transcendentals=0,
        bytes_accessed=int(N * Cin * Lext * in_item
                           + K * K * nb * Cout * nb * Cin * in_item
                           + (nb * Cout * 4 if has_bias else 0)
                           + N * Cout * m_pad * out_item),
    )

    out_dense = pl.pallas_call(
        kernel,
        out_shape=jax.ShapeDtypeStruct((N * Cout, m_pad), x_nchw.dtype),
        grid_spec=pltpu.PrefetchScalarGridSpec(
            num_scalar_prefetch=0,
            grid=(n_steps,),
            in_specs=in_specs,
            out_specs=pl.BlockSpec((nb * Cout, m_pad), lambda i: (i, 0)),
        ),
        compiler_params=pltpu.CompilerParams(
            dimension_semantics=("parallel",),
            vmem_limit_bytes=vmem_limit,
        ),
        cost_estimate=cost,
    )(*inputs)

    # Free reshape to (N, Cout, Hd, Wp); crop lane padding, wrapped columns,
    # and (for stride>1) decimate.
    out = out_dense.reshape(N, Cout, m_pad)[:, :, :m_dense].reshape(N, Cout, Hd, Wp)
    if stride > 1:
        # TODO(synk): decimate inside the kernel (strided lane slices) to avoid
        #             ~stride^2 x wasted output DMA + MXU work for strided layers.
        out = out[:, :, ::stride, ::stride]
    return out[:, :, :Ho, :Wo]


if __name__ == "__main__":
    # Module config: QuantConv2d(channels_in=4, channels_out=8, kernel_size=3,
    # stride=1, padding=None -> 1, bias=False).
    N, Cin, H, W = 2, 4, 16, 16
    Cout, K, stride = 8, 3, 1

    key = jax.random.PRNGKey(0)
    kx, kw, kb = jax.random.split(key, 3)
    x = jax.random.normal(kx, (N, Cin, H, W), dtype=jnp.float32)
    # In the original module kernel_q is zeros until _quantization() is called;
    # use deterministic random values so the conv kernel is actually exercised.
    kernel_q = jax.random.normal(kw, (Cout, Cin, K, K), dtype=jnp.float32)

    out = quant_conv2d_forward(x, kernel_q, bias=None, stride=stride)
    out = jax.block_until_ready(out)

    # Reference check against XLA's conv (same semantics as F.conv2d).
    ref = jax.lax.conv_general_dilated(
        x, kernel_q,
        window_strides=(stride, stride),
        padding=[(K // 2, K // 2), (K // 2, K // 2)],
        dimension_numbers=("NCHW", "OIHW", "NCHW"),
    )
    np.testing.assert_allclose(np.asarray(out), np.asarray(ref), rtol=1e-5, atol=1e-5)

    # Also exercise the fused-bias epilogue path (module supports bias=True).
    bias = jax.random.normal(kb, (Cout,), dtype=jnp.float32)
    out_b = jax.block_until_ready(
        quant_conv2d_forward(x, kernel_q, bias=bias, stride=stride))
    np.testing.assert_allclose(np.asarray(out_b),
                               np.asarray(ref + bias.reshape(1, Cout, 1, 1)),
                               rtol=1e-5, atol=1e-5)

    print("KERNEL_OK")
</pallas_src>

<mosaic_0001>
module attributes {stable_mosaic.version = 11 : i64} {
  func.func @_conv_kernel(%arg0: i32, %arg1: memref<8x512xf32, #tpu.memory_space<vmem>>, %arg2: memref<9x16x8xf32, #tpu.memory_space<vmem>>, %arg3: memref<16x384xf32, #tpu.memory_space<vmem>>) attributes {dimension_semantics = [#tpu.dimension_semantics<parallel>], iteration_bounds = array<i64: 1>, scalar_prefetch = 0 : i64, scratch_operands = 0 : i64, tpu.core_type = #tpu.core_type<tc>, window_params = [{transform_indices = @transform_0, window_bounds = array<i64: 8, 512>}, {pipeline_mode = #tpu.pipeline_mode<synchronous>, transform_indices = @transform_1, window_bounds = array<i64: 9, 16, 8>}, {transform_indices = @transform_2, window_bounds = array<i64: 16, 384>}]} {
    %c0 = arith.constant 0 : index
    %c0_0 = arith.constant 0 : index
    %c0_1 = arith.constant 0 : index
    %0 = vector.load %arg2[%c0, %c0_0, %c0_1] : memref<9x16x8xf32, #tpu.memory_space<vmem>>, vector<1x16x8xf32>
    %1 = vector.shape_cast %0 : vector<1x16x8xf32> to vector<16x8xf32>
    %c0_2 = arith.constant 0 : index
    %c0_3 = arith.constant 0 : index
    %2 = vector.load %arg1[%c0_2, %c0_3] : memref<8x512xf32, #tpu.memory_space<vmem>>, vector<8x384xf32>
    %cst = arith.constant dense<0.000000e+00> : vector<16x384xf32>
    %3 = tpu.matmul %1, %2, %cst {dimension_numbers = #tpu.dot_dimension_numbers<[1], [0], [0], [1], [0, 0, 1, 1], [], []>} : vector<16x8xf32>, vector<8x384xf32>, vector<16x384xf32> -> vector<16x384xf32>
    %c1 = arith.constant 1 : index
    %c0_4 = arith.constant 0 : index
    %c0_5 = arith.constant 0 : index
    %4 = vector.load %arg2[%c1, %c0_4, %c0_5] : memref<9x16x8xf32, #tpu.memory_space<vmem>>, vector<1x16x8xf32>
    %5 = vector.shape_cast %4 : vector<1x16x8xf32> to vector<16x8xf32>
    %c0_6 = arith.constant 0 : index
    %c1_7 = arith.constant 1 : index
    %6 = vector.load %arg1[%c0_6, %c1_7] : memref<8x512xf32, #tpu.memory_space<vmem>>, vector<8x384xf32>
    %cst_8 = arith.constant dense<0.000000e+00> : vector<16x384xf32>
    %7 = tpu.matmul %5, %6, %cst_8 {dimension_numbers = #tpu.dot_dimension_numbers<[1], [0], [0], [1], [0, 0, 1, 1], [], []>} : vector<16x8xf32>, vector<8x384xf32>, vector<16x384xf32> -> vector<16x384xf32>
    %8 = arith.addf %3, %7 : vector<16x384xf32>
    %c2 = arith.constant 2 : index
    %c0_9 = arith.constant 0 : index
    %c0_10 = arith.constant 0 : index
    %9 = vector.load %arg2[%c2, %c0_9, %c0_10] : memref<9x16x8xf32, #tpu.memory_space<vmem>>, vector<1x16x8xf32>
    %10 = vector.shape_cast %9 : vector<1x16x8xf32> to vector<16x8xf32>
    %c0_11 = arith.constant 0 : index
    %c2_12 = arith.constant 2 : index
    %11 = vector.load %arg1[%c0_11, %c2_12] : memref<8x512xf32, #tpu.memory_space<vmem>>, vector<8x384xf32>
    %cst_13 = arith.constant dense<0.000000e+00> : vector<16x384xf32>
    %12 = tpu.matmul %10, %11, %cst_13 {dimension_numbers = #tpu.dot_dimension_numbers<[1], [0], [0], [1], [0, 0, 1, 1], [], []>} : vector<16x8xf32>, vector<8x384xf32>, vector<16x384xf32> -> vector<16x384xf32>
    %13 = arith.addf %8, %12 : vector<16x384xf32>
    %c3 = arith.constant 3 : index
    %c0_14 = arith.constant 0 : index
    %c0_15 = arith.constant 0 : index
    %14 = vector.load %arg2[%c3, %c0_14, %c0_15] : memref<9x16x8xf32, #tpu.memory_space<vmem>>, vector<1x16x8xf32>
    %15 = vector.shape_cast %14 : vector<1x16x8xf32> to vector<16x8xf32>
    %c0_16 = arith.constant 0 : index
    %c18 = arith.constant 18 : index
    %16 = vector.load %arg1[%c0_16, %c18] : memref<8x512xf32, #tpu.memory_space<vmem>>, vector<8x384xf32>
    %cst_17 = arith.constant dense<0.000000e+00> : vector<16x384xf32>
    %17 = tpu.matmul %15, %16, %cst_17 {dimension_numbers = #tpu.dot_dimension_numbers<[1], [0], [0], [1], [0, 0, 1, 1], [], []>} : vector<16x8xf32>, vector<8x384xf32>, vector<16x384xf32> -> vector<16x384xf32>
    %18 = arith.addf %13, %17 : vector<16x384xf32>
    %c4 = arith.constant 4 : index
    %c0_18 = arith.constant 0 : index
    %c0_19 = arith.constant 0 : index
    %19 = vector.load %arg2[%c4, %c0_18, %c0_19] : memref<9x16x8xf32, #tpu.memory_space<vmem>>, vector<1x16x8xf32>
    %20 = vector.shape_cast %19 : vector<1x16x8xf32> to vector<16x8xf32>
    %c0_20 = arith.constant 0 : index
    %c19 = arith.constant 19 : index
    %21 = vector.load %arg1[%c0_20, %c19] : memref<8x512xf32, #tpu.memory_space<vmem>>, vector<8x384xf32>
    %cst_21 = arith.constant dense<0.000000e+00> : vector<16x384xf32>
    %22 = tpu.matmul %20, %21, %cst_21 {dimension_numbers = #tpu.dot_dimension_numbers<[1], [0], [0], [1], [0, 0, 1, 1], [], []>} : vector<16x8xf32>, vector<8x384xf32>, vector<16x384xf32> -> vector<16x384xf32>
    %23 = arith.addf %18, %22 : vector<16x384xf32>
    %c5 = arith.constant 5 : index
    %c0_22 = arith.constant 0 : index
    %c0_23 = arith.constant 0 : index
    %24 = vector.load %arg2[%c5, %c0_22, %c0_23] : memref<9x16x8xf32, #tpu.memory_space<vmem>>, vector<1x16x8xf32>
    %25 = vector.shape_cast %24 : vector<1x16x8xf32> to vector<16x8xf32>
    %c0_24 = arith.constant 0 : index
    %c20 = arith.constant 20 : index
    %26 = vector.load %arg1[%c0_24, %c20] : memref<8x512xf32, #tpu.memory_space<vmem>>, vector<8x384xf32>
    %cst_25 = arith.constant dense<0.000000e+00> : vector<16x384xf32>
    %27 = tpu.matmul %25, %26, %cst_25 {dimension_numbers = #tpu.dot_dimension_numbers<[1], [0], [0], [1], [0, 0, 1, 1], [], []>} : vector<16x8xf32>, vector<8x384xf32>, vector<16x384xf32> -> vector<16x384xf32>
    %28 = arith.addf %23, %27 : vector<16x384xf32>
    %c6 = arith.constant 6 : index
    %c0_26 = arith.constant 0 : index
    %c0_27 = arith.constant 0 : index
    %29 = vector.load %arg2[%c6, %c0_26, %c0_27] : memref<9x16x8xf32, #tpu.memory_space<vmem>>, vector<1x16x8xf32>
    %30 = vector.shape_cast %29 : vector<1x16x8xf32> to vector<16x8xf32>
    %c0_28 = arith.constant 0 : index
    %c36 = arith.constant 36 : index
    %31 = vector.load %arg1[%c0_28, %c36] : memref<8x512xf32, #tpu.memory_space<vmem>>, vector<8x384xf32>
    %cst_29 = arith.constant dense<0.000000e+00> : vector<16x384xf32>
    %32 = tpu.matmul %30, %31, %cst_29 {dimension_numbers = #tpu.dot_dimension_numbers<[1], [0], [0], [1], [0, 0, 1, 1], [], []>} : vector<16x8xf32>, vector<8x384xf32>, vector<16x384xf32> -> vector<16x384xf32>
    %33 = arith.addf %28, %32 : vector<16x384xf32>
    %c7 = arith.constant 7 : index
    %c0_30 = arith.constant 0 : index
    %c0_31 = arith.constant 0 : index
    %34 = vector.load %arg2[%c7, %c0_30, %c0_31] : memref<9x16x8xf32, #tpu.memory_space<vmem>>, vector<1x16x8xf32>
    %35 = vector.shape_cast %34 : vector<1x16x8xf32> to vector<16x8xf32>
    %c0_32 = arith.constant 0 : index
    %c37 = arith.constant 37 : index
    %36 = vector.load %arg1[%c0_32, %c37] : memref<8x512xf32, #tpu.memory_space<vmem>>, vector<8x384xf32>
    %cst_33 = arith.constant dense<0.000000e+00> : vector<16x384xf32>
    %37 = tpu.matmul %35, %36, %cst_33 {dimension_numbers = #tpu.dot_dimension_numbers<[1], [0], [0], [1], [0, 0, 1, 1], [], []>} : vector<16x8xf32>, vector<8x384xf32>, vector<16x384xf32> -> vector<16x384xf32>
    %38 = arith.addf %33, %37 : vector<16x384xf32>
    %c8 = arith.constant 8 : index
    %c0_34 = arith.constant 0 : index
    %c0_35 = arith.constant 0 : index
    %39 = vector.load %arg2[%c8, %c0_34, %c0_35] : memref<9x16x8xf32, #tpu.memory_space<vmem>>, vector<1x16x8xf32>
    %40 = vector.shape_cast %39 : vector<1x16x8xf32> to vector<16x8xf32>
    %c0_36 = arith.constant 0 : index
    %c38 = arith.constant 38 : index
    %41 = vector.load %arg1[%c0_36, %c38] : memref<8x512xf32, #tpu.memory_space<vmem>>, vector<8x384xf32>
    %cst_37 = arith.constant dense<0.000000e+00> : vector<16x384xf32>
    %42 = tpu.matmul %40, %41, %cst_37 {dimension_numbers = #tpu.dot_dimension_numbers<[1], [0], [0], [1], [0, 0, 1, 1], [], []>} : vector<16x8xf32>, vector<8x384xf32>, vector<16x384xf32> -> vector<16x384xf32>
    %43 = arith.addf %38, %42 : vector<16x384xf32>
    %c0_38 = arith.constant 0 : index
    %c0_39 = arith.constant 0 : index
    %44 = vector.load %arg3[%c0_38, %c0_39] : memref<16x384xf32, #tpu.memory_space<vmem>>, vector<16x384xf32>
    tpu.vector_store %arg3[%c0_38, %c0_39], %43 {strides = array<i32>} : memref<16x384xf32, #tpu.memory_space<vmem>>, vector<16x384xf32>,
    return
  }
  func.func @transform_0(%arg0: i32) -> (i32, i32) {
    %c0_i32 = arith.constant 0 : i32
    %c0_i32_0 = arith.constant 0 : i32
    return %arg0, %c0_i32 : i32, i32
  }
  func.func @transform_1(%arg0: i32) -> (i32, i32, i32) {
    %c0_i32 = arith.constant 0 : i32
    %c0_i32_0 = arith.constant 0 : i32
    %c0_i32_1 = arith.constant 0 : i32
    %c0_i32_2 = arith.constant 0 : i32
    return %c0_i32, %c0_i32_0, %c0_i32_1 : i32, i32, i32
  }
  func.func @transform_2(%arg0: i32) -> (i32, i32) {
    %c0_i32 = arith.constant 0 : i32
    %c0_i32_0 = arith.constant 0 : i32
    return %arg0, %c0_i32 : i32, i32
  }
}

</mosaic_0001>

<llo_original>
// kernel: tpu_custom_call.1
$region0: #{tpu_custom_call.1}
  #allocation0 [shape = 'u32[]', space=smem, size = 0x4, offset = 0x4, fixed_abs, tag = 'smem constant byte address 0x4 - core index']
  #allocation1 [shape = 'u32[72,128]{1,0:T(1,128)}', space=vmem, size = 0x9000, scoped, tag = 'internal scratch']
  %s0 = inlined_call_operand.vmem [shape: f32[8,512], index: 0, kind: input, shape index: {}]
  %s1 = inlined_call_operand.vmem [shape: f32[9,16,8], index: 1, kind: input, shape index: {}]
  %s2 = inlined_call_operand.hbm [shape: f32[16,384], index: 2, kind: output, shape index: {}]
  %s3 = sld [smem:[#allocation0]]
  $region18: #{tpu_custom_call.1} parent=0
    _
  %s5 = ssub.s32 1, %s3
  %s6 = scalar_select 0, %s5, %s3
  $region1: #{tpu_custom_call.1} parent=0
    #allocation2 [shape = 'u8[24576]{0}', space=vmem, size = 0x6000, scoped, tag = 'output window, operand 0, single buffered']
    #allocation3 [shape = 's32[1]{0}', space=sflag, size = 0x4, scoped, tag = 'scoped memory for tpu_custom_call.1']
    %7 = vsyncpa [#allocation3], 0
    // Predicated region
    $region2: #{tpu_custom_call.1} parent=1 // pred_check
      _
    $region3: #{tpu_custom_call.1} parent=1 // pred_check_branch
      %9 = sbr.rel (0) target = $region5
    $region4: #{tpu_custom_call.1} parent=1 // pred_region
      _
    $region5: #{tpu_custom_call.1} parent=1 // pred_fallthru
      _
    // Predicated region
    $region6: #{tpu_custom_call.1} parent=1 // pred_check
      _
    $region7: #{tpu_custom_call.1} parent=1 // pred_check_branch
      %11 = sbr.rel (0) target = $region9
    $region8: #{tpu_custom_call.1} parent=1 // pred_region
      _
    $region9: #{tpu_custom_call.1} parent=1 // pred_fallthru
      _
    %v12 = vld [vmem:[%s1] sm:$0xff]
    %v13 = vld [vmem:[%s1 + $0x8] sm:$0xff]
    %v14 = vld [vmem:[%s0] sm:$0xff]
    %v15 = vld [vmem:[%s0 + $0x8] sm:$0xff]
    %v16 = vld [vmem:[%s0 + $0x10] sm:$0xff]
    %s17 = scalar_lea.vmem %s1, 16
    %v18 = vld [vmem:[%s17] sm:$0xff]
    %v19 = vld [vmem:[%s17 + $0x8] sm:$0xff]
    %v20 = vld [vmem:[%s0] sm:$0xff]
    %v21 = vld [vmem:[%s0 + $0x8] sm:$0xff]
    %v22 = vld [vmem:[%s0 + $0x10] sm:$0xff]
    %v23 = vld [vmem:[%s0 + $0x18] sm:$0xff]
    %28 = vrot.lane.b32.xlu0 %v20, 127
    %v29 = vpop.permute.xlu0 %28
    %30 = vrot.lane.b32.xlu0 %v21, 127
    %v31 = vpop.permute.xlu0 %30
    %32 = vrot.lane.b32.xlu0 %v22, 127
    %v33 = vpop.permute.xlu0 %32
    %34 = vrot.lane.b32.xlu0 %v23, 127
    %v35 = vpop.permute.xlu0 %34
    %vm36 = vcmask 1039360
    %v37 = vsel %vm36, %v29, %v31
    %v38 = vsel %vm36, %v31, %v33
    %v39 = vsel %vm36, %v33, %v35
    %vm43 = vcmask 64512
    %v45 = vsel %vm43, %v18, 0
    %v48 = vsel %vm43, %v19, 0
    %50 = vmatpush.msra.mxu0 0.0
    %51 = vmatpush.msra.mxu0 0.0
    %52 = vmatpush.msra.mxu0 0.0
    %53 = vmatpush.msra.mxu0 0.0
    %54 = vmatpush.msra.mxu0 0.0
    %55 = vmatpush.msra.mxu0 0.0
    %56 = vmatpush.msra.mxu0 0.0
    %57 = vmatpush.msra.mxu0 0.0
    %58 = vmatpush.msra.mxu0 0.0
    %59 = vmatpush.msra.mxu0 0.0
    %60 = vmatpush.msra.mxu0 0.0
    %61 = vmatpush.msra.mxu0 0.0
    %62 = vmatpush.msra.mxu0 0.0
    %63 = vmatpush.msra.mxu0 0.0
    %64 = vmatpush.msra.mxu0 0.0
    %65 = vmatpush.msra.mxu0 %v37
    %66 = vmatmul.f32.gmra.mxu0 %v45
    %v67 = vpop.f32.mrf.mxu0
    %v68 = vadd.f32 0.0, %v67
    %69 = vmatmul.f32.gmra.mxu0 %v48
    %v70 = vpop.f32.mrf.mxu0
    %v71 = vadd.f32 0.0, %v70
    %72 = vdwg.mxu0
    %73 = vmatpush.msra.mxu0 0.0
    %74 = vmatpush.msra.mxu0 0.0
    %75 = vmatpush.msra.mxu0 0.0
    %76 = vmatpush.msra.mxu0 0.0
    %77 = vmatpush.msra.mxu0 0.0
    %78 = vmatpush.msra.mxu0 0.0
    %79 = vmatpush.msra.mxu0 0.0
    %80 = vmatpush.msra.mxu0 0.0
    %81 = vmatpush.msra.mxu0 0.0
    %82 = vmatpush.msra.mxu0 0.0
    %83 = vmatpush.msra.mxu0 0.0
    %84 = vmatpush.msra.mxu0 0.0
    %85 = vmatpush.msra.mxu0 0.0
    %86 = vmatpush.msra.mxu0 0.0
    %87 = vmatpush.msra.mxu0 0.0
    %88 = vmatpush.msra.mxu0 %v38
    %89 = vmatmul.f32.gmra.mxu0 %v45
    %v90 = vpop.f32.mrf.mxu0
    %v91 = vadd.f32 0.0, %v90
    %92 = vmatmul.f32.gmra.mxu0 %v48
    %v93 = vpop.f32.mrf.mxu0
    %v94 = vadd.f32 0.0, %v93
    %95 = vdwg.mxu0
    %96 = vmatpush.msra.mxu0 0.0
    %97 = vmatpush.msra.mxu0 0.0
    %98 = vmatpush.msra.mxu0 0.0
    %99 = vmatpush.msra.mxu0 0.0
    %100 = vmatpush.msra.mxu0 0.0
    %101 = vmatpush.msra.mxu0 0.0
    %102 = vmatpush.msra.mxu0 0.0
    %103 = vmatpush.msra.mxu0 0.0
    %104 = vmatpush.msra.mxu0 0.0
    %105 = vmatpush.msra.mxu0 0.0
    %106 = vmatpush.msra.mxu0 0.0
    %107 = vmatpush.msra.mxu0 0.0
    %108 = vmatpush.msra.mxu0 0.0
    %109 = vmatpush.msra.mxu0 0.0
    %110 = vmatpush.msra.mxu0 0.0
    %111 = vmatpush.msra.mxu0 %v39
    %112 = vmatmul.f32.gmra.mxu0 %v45
    %v113 = vpop.f32.mrf.mxu0
    %v114 = vadd.f32 0.0, %v113
    %115 = vmatmul.f32.gmra.mxu0 %v48
    %v116 = vpop.f32.mrf.mxu0
    %v117 = vadd.f32 0.0, %v116
    %118 = vdwg.mxu0
    %v120 = vsel %vm43, %v12, 0
    %v123 = vsel %vm43, %v13, 0
    %125 = vmatpush.msra.mxu0 0.0
    %126 = vmatpush.msra.mxu0 0.0
    %127 = vmatpush.msra.mxu0 0.0
    %128 = vmatpush.msra.mxu0 0.0
    %129 = vmatpush.msra.mxu0 0.0
    %130 = vmatpush.msra.mxu0 0.0
    %131 = vmatpush.msra.mxu0 0.0
    %132 = vmatpush.msra.mxu0 0.0
    %133 = vmatpush.msra.mxu0 0.0
    %134 = vmatpush.msra.mxu0 0.0
    %135 = vmatpush.msra.mxu0 0.0
    %136 = vmatpush.msra.mxu0 0.0
    %137 = vmatpush.msra.mxu0 0.0
    %138 = vmatpush.msra.mxu0 0.0
    %139 = vmatpush.msra.mxu0 0.0
    %140 = vmatpush.msra.mxu0 %v14
    %141 = vmatmul.f32.gmra.mxu0 %v120
    %v142 = vpop.f32.mrf.mxu0
    %v143 = vadd.f32 %v68, %v142
    %144 = vmatmul.f32.gmra.mxu0 %v123
    %v145 = vpop.f32.mrf.mxu0
    %v146 = vadd.f32 %v71, %v145
    %147 = vdwg.mxu0
    %148 = vmatpush.msra.mxu0 0.0
    %149 = vmatpush.msra.mxu0 0.0
    %150 = vmatpush.msra.mxu0 0.0
    %151 = vmatpush.msra.mxu0 0.0
    %152 = vmatpush.msra.mxu0 0.0
    %153 = vmatpush.msra.mxu0 0.0
    %154 = vmatpush.msra.mxu0 0.0
    %155 = vmatpush.msra.mxu0 0.0
    %156 = vmatpush.msra.mxu0 0.0
    %157 = vmatpush.msra.mxu0 0.0
    %158 = vmatpush.msra.mxu0 0.0
    %159 = vmatpush.msra.mxu0 0.0
    %160 = vmatpush.msra.mxu0 0.0
    %161 = vmatpush.msra.mxu0 0.0
    %162 = vmatpush.msra.mxu0 0.0
    %163 = vmatpush.msra.mxu0 %v15
    %164 = vmatmul.f32.gmra.mxu0 %v120
    %v165 = vpop.f32.mrf.mxu0
    %v166 = vadd.f32 %v91, %v165
    %167 = vmatmul.f32.gmra.mxu0 %v123
    %v168 = vpop.f32.mrf.mxu0
    %v169 = vadd.f32 %v94, %v168
    %170 = vdwg.mxu0
    %171 = vmatpush.msra.mxu0 0.0
    %172 = vmatpush.msra.mxu0 0.0
    %173 = vmatpush.msra.mxu0 0.0
    %174 = vmatpush.msra.mxu0 0.0
    %175 = vmatpush.msra.mxu0 0.0
    %176 = vmatpush.msra.mxu0 0.0
    %177 = vmatpush.msra.mxu0 0.0
    %178 = vmatpush.msra.mxu0 0.0
    %179 = vmatpush.msra.mxu0 0.0
    %180 = vmatpush.msra.mxu0 0.0
    %181 = vmatpush.msra.mxu0 0.0
    %182 = vmatpush.msra.mxu0 0.0
    %183 = vmatpush.msra.mxu0 0.0
    %184 = vmatpush.msra.mxu0 0.0
    %185 = vmatpush.msra.mxu0 0.0
    %186 = vmatpush.msra.mxu0 %v16
    %187 = vmatmul.f32.gmra.mxu0 %v120
    %v188 = vpop.f32.mrf.mxu0
    %v189 = vadd.f32 %v114, %v188
    %190 = vmatmul.f32.gmra.mxu0 %v123
    %v191 = vpop.f32.mrf.mxu0
    %v192 = vadd.f32 %v117, %v191
    %193 = vdwg.mxu0
    %s194 = scalar_lea.vmem %s1, 32
    %v195 = vld [vmem:[%s194] sm:$0xff]
    %v196 = vld [vmem:[%s194 + $0x8] sm:$0xff]
    %197 = vrot.lane.b32.xlu0 %v20, 126
    %v198 = vpop.permute.xlu0 %197
    %199 = vrot.lane.b32.xlu0 %v21, 126
    %v200 = vpop.permute.xlu0 %199
    %201 = vrot.lane.b32.xlu0 %v22, 126
    %v202 = vpop.permute.xlu0 %201
    %203 = vrot.lane.b32.xlu0 %v23, 126
    %v204 = vpop.permute.xlu0 %203
    %vm205 = vcmask 1031168
    %v206 = vsel %vm205, %v198, %v200
    %v207 = vsel %vm205, %v200, %v202
    %v208 = vsel %vm205, %v202, %v204
    %v213 = vsel %vm43, %v195, 0
    %v216 = vsel %vm43, %v196, 0
    %218 = vmatpush.msra.mxu0 0.0
    %219 = vmatpush.msra.mxu0 0.0
    %220 = vmatpush.msra.mxu0 0.0
    %221 = vmatpush.msra.mxu0 0.0
    %222 = vmatpush.msra.mxu0 0.0
    %223 = vmatpush.msra.mxu0 0.0
    %224 = vmatpush.msra.mxu0 0.0
    %225 = vmatpush.msra.mxu0 0.0
    %226 = vmatpush.msra.mxu0 0.0
    %227 = vmatpush.msra.mxu0 0.0
    %228 = vmatpush.msra.mxu0 0.0
    %229 = vmatpush.msra.mxu0 0.0
    %230 = vmatpush.msra.mxu0 0.0
    %231 = vmatpush.msra.mxu0 0.0
    %232 = vmatpush.msra.mxu0 0.0
    %233 = vmatpush.msra.mxu0 %v206
    %234 = vmatmul.f32.gmra.mxu0 %v213
    %v235 = vpop.f32.mrf.mxu0
    %v236 = vadd.f32 0.0, %v235
    %237 = vmatmul.f32.gmra.mxu0 %v216
    %v238 = vpop.f32.mrf.mxu0
    %v239 = vadd.f32 0.0, %v238
    %240 = vdwg.mxu0
    %241 = vmatpush.msra.mxu0 0.0
    %242 = vmatpush.msra.mxu0 0.0
    %243 = vmatpush.msra.mxu0 0.0
    %244 = vmatpush.msra.mxu0 0.0
    %245 = vmatpush.msra.mxu0 0.0
    %246 = vmatpush.msra.mxu0 0.0
    %247 = vmatpush.msra.mxu0 0.0
    %248 = vmatpush.msra.mxu0 0.0
    %249 = vmatpush.msra.mxu0 0.0
    %250 = vmatpush.msra.mxu0 0.0
    %251 = vmatpush.msra.mxu0 0.0
    %252 = vmatpush.msra.mxu0 0.0
    %253 = vmatpush.msra.mxu0 0.0
    %254 = vmatpush.msra.mxu0 0.0
    %255 = vmatpush.msra.mxu0 0.0
    %256 = vmatpush.msra.mxu0 %v207
    %257 = vmatmul.f32.gmra.mxu0 %v213
    %v258 = vpop.f32.mrf.mxu0
    %v259 = vadd.f32 0.0, %v258
    %260 = vmatmul.f32.gmra.mxu0 %v216
    %v261 = vpop.f32.mrf.mxu0
    %v262 = vadd.f32 0.0, %v261
    %263 = vdwg.mxu0
    %264 = vmatpush.msra.mxu0 0.0
    %265 = vmatpush.msra.mxu0 0.0
    %266 = vmatpush.msra.mxu0 0.0
    %267 = vmatpush.msra.mxu0 0.0
    %268 = vmatpush.msra.mxu0 0.0
    %269 = vmatpush.msra.mxu0 0.0
    %270 = vmatpush.msra.mxu0 0.0
    %271 = vmatpush.msra.mxu0 0.0
    %272 = vmatpush.msra.mxu0 0.0
    %273 = vmatpush.msra.mxu0 0.0
    %274 = vmatpush.msra.mxu0 0.0
    %275 = vmatpush.msra.mxu0 0.0
    %276 = vmatpush.msra.mxu0 0.0
    %277 = vmatpush.msra.mxu0 0.0
    %278 = vmatpush.msra.mxu0 0.0
    %279 = vmatpush.msra.mxu0 %v208
    %280 = vmatmul.f32.gmra.mxu0 %v213
    %v281 = vpop.f32.mrf.mxu0
    %v282 = vadd.f32 0.0, %v281
    %283 = vmatmul.f32.gmra.mxu0 %v216
    %v284 = vpop.f32.mrf.mxu0
    %v285 = vadd.f32 0.0, %v284
    %286 = vdwg.mxu0
    %v287 = vadd.f32 %v143, %v236
    %v288 = vadd.f32 %v166, %v259
    %v289 = vadd.f32 %v189, %v282
    %v290 = vadd.f32 %v146, %v239
    %v291 = vadd.f32 %v169, %v262
    %v292 = vadd.f32 %v192, %v285
    %s293 = scalar_lea.vmem %s1, 48
    %v294 = vld [vmem:[%s293] sm:$0xff]
    %v295 = vld [vmem:[%s293 + $0x8] sm:$0xff]
    %296 = vrot.lane.b32.xlu0 %v20, 110
    %v297 = vpop.permute.xlu0 %296
    %298 = vrot.lane.b32.xlu0 %v21, 110
    %v299 = vpop.permute.xlu0 %298
    %300 = vrot.lane.b32.xlu0 %v22, 110
    %v301 = vpop.permute.xlu0 %300
    %302 = vrot.lane.b32.xlu0 %v23, 110
    %v303 = vpop.permute.xlu0 %302
    %vm304 = vcmask 900096
    %v305 = vsel %vm304, %v297, %v299
    %v306 = vsel %vm304, %v299, %v301
    %v307 = vsel %vm304, %v301, %v303
    %v312 = vsel %vm43, %v294, 0
    %v315 = vsel %vm43, %v295, 0
    %317 = vmatpush.msra.mxu0 0.0
    %318 = vmatpush.msra.mxu0 0.0
    %319 = vmatpush.msra.mxu0 0.0
    %320 = vmatpush.msra.mxu0 0.0
    %321 = vmatpush.msra.mxu0 0.0
    %322 = vmatpush.msra.mxu0 0.0
    %323 = vmatpush.msra.mxu0 0.0
    %324 = vmatpush.msra.mxu0 0.0
    %325 = vmatpush.msra.mxu0 0.0
    %326 = vmatpush.msra.mxu0 0.0
    %327 = vmatpush.msra.mxu0 0.0
    %328 = vmatpush.msra.mxu0 0.0
    %329 = vmatpush.msra.mxu0 0.0
    %330 = vmatpush.msra.mxu0 0.0
    %331 = vmatpush.msra.mxu0 0.0
    %332 = vmatpush.msra.mxu0 %v305
    %333 = vmatmul.f32.gmra.mxu0 %v312
    %v334 = vpop.f32.mrf.mxu0
    %v335 = vadd.f32 0.0, %v334
    %336 = vmatmul.f32.gmra.mxu0 %v315
    %v337 = vpop.f32.mrf.mxu0
    %v338 = vadd.f32 0.0, %v337
    %339 = vdwg.mxu0
    %340 = vmatpush.msra.mxu0 0.0
    %341 = vmatpush.msra.mxu0 0.0
    %342 = vmatpush.msra.mxu0 0.0
    %343 = vmatpush.msra.mxu0 0.0
    %344 = vmatpush.msra.mxu0 0.0
    %345 = vmatpush.msra.mxu0 0.0
    %346 = vmatpush.msra.mxu0 0.0
    %347 = vmatpush.msra.mxu0 0.0
    %348 = vmatpush.msra.mxu0 0.0
    %349 = vmatpush.msra.mxu0 0.0
    %350 = vmatpush.msra.mxu0 0.0
    %351 = vmatpush.msra.mxu0 0.0
    %352 = vmatpush.msra.mxu0 0.0
    %353 = vmatpush.msra.mxu0 0.0
    %354 = vmatpush.msra.mxu0 0.0
    %355 = vmatpush.msra.mxu0 %v306
    %356 = vmatmul.f32.gmra.mxu0 %v312
    %v357 = vpop.f32.mrf.mxu0
    %v358 = vadd.f32 0.0, %v357
    %359 = vmatmul.f32.gmra.mxu0 %v315
    %v360 = vpop.f32.mrf.mxu0
    %v361 = vadd.f32 0.0, %v360
    %362 = vdwg.mxu0
    %363 = vmatpush.msra.mxu0 0.0
    %364 = vmatpush.msra.mxu0 0.0
    %365 = vmatpush.msra.mxu0 0.0
    %366 = vmatpush.msra.mxu0 0.0
    %367 = vmatpush.msra.mxu0 0.0
    %368 = vmatpush.msra.mxu0 0.0
    %369 = vmatpush.msra.mxu0 0.0
    %370 = vmatpush.msra.mxu0 0.0
    %371 = vmatpush.msra.mxu0 0.0
    %372 = vmatpush.msra.mxu0 0.0
    %373 = vmatpush.msra.mxu0 0.0
    %374 = vmatpush.msra.mxu0 0.0
    %375 = vmatpush.msra.mxu0 0.0
    %376 = vmatpush.msra.mxu0 0.0
    %377 = vmatpush.msra.mxu0 0.0
    %378 = vmatpush.msra.mxu0 %v307
    %379 = vmatmul.f32.gmra.mxu0 %v312
    %v380 = vpop.f32.mrf.mxu0
    %v381 = vadd.f32 0.0, %v380
    %382 = vmatmul.f32.gmra.mxu0 %v315
    %v383 = vpop.f32.mrf.mxu0
    %v384 = vadd.f32 0.0, %v383
    %385 = vdwg.mxu0
    %v386 = vadd.f32 %v287, %v335
    %v387 = vadd.f32 %v288, %v358
    %v388 = vadd.f32 %v289, %v381
    %v389 = vadd.f32 %v290, %v338
    %v390 = vadd.f32 %v291, %v361
    %v391 = vadd.f32 %v292, %v384
    %s392 = scalar_lea.vmem %s1, 64
    %v393 = vld [vmem:[%s392] sm:$0xff]
    %v394 = vld [vmem:[%s392 + $0x8] sm:$0xff]
    %395 = vrot.lane.b32.xlu0 %v20, 109
    %v396 = vpop.permute.xlu0 %395
    %397 = vrot.lane.b32.xlu0 %v21, 109
    %v398 = vpop.permute.xlu0 %397
    %399 = vrot.lane.b32.xlu0 %v22, 109
    %v400 = vpop.permute.xlu0 %399
    %401 = vrot.lane.b32.xlu0 %v23, 109
    %v402 = vpop.permute.xlu0 %401
    %vm403 = vcmask 891904
    %v404 = vsel %vm403, %v396, %v398
    %v405 = vsel %vm403, %v398, %v400
    %v406 = vsel %vm403, %v400, %v402
    %v411 = vsel %vm43, %v393, 0
    %v414 = vsel %vm43, %v394, 0
    %416 = vmatpush.msra.mxu0 0.0
    %417 = vmatpush.msra.mxu0 0.0
    %418 = vmatpush.msra.mxu0 0.0
    %419 = vmatpush.msra.mxu0 0.0
    %420 = vmatpush.msra.mxu0 0.0
    %421 = vmatpush.msra.mxu0 0.0
    %422 = vmatpush.msra.mxu0 0.0
    %423 = vmatpush.msra.mxu0 0.0
    %424 = vmatpush.msra.mxu0 0.0
    %425 = vmatpush.msra.mxu0 0.0
    %426 = vmatpush.msra.mxu0 0.0
    %427 = vmatpush.msra.mxu0 0.0
    %428 = vmatpush.msra.mxu0 0.0
    %429 = vmatpush.msra.mxu0 0.0
    %430 = vmatpush.msra.mxu0 0.0
    %431 = vmatpush.msra.mxu0 %v404
    %432 = vmatmul.f32.gmra.mxu0 %v411
    %v433 = vpop.f32.mrf.mxu0
    %v434 = vadd.f32 0.0, %v433
    %435 = vmatmul.f32.gmra.mxu0 %v414
    %v436 = vpop.f32.mrf.mxu0
    %v437 = vadd.f32 0.0, %v436
    %438 = vdwg.mxu0
    %439 = vmatpush.msra.mxu0 0.0
    %440 = vmatpush.msra.mxu0 0.0
    %441 = vmatpush.msra.mxu0 0.0
    %442 = vmatpush.msra.mxu0 0.0
    %443 = vmatpush.msra.mxu0 0.0
    %444 = vmatpush.msra.mxu0 0.0
    %445 = vmatpush.msra.mxu0 0.0
    %446 = vmatpush.msra.mxu0 0.0
    %447 = vmatpush.msra.mxu0 0.0
    %448 = vmatpush.msra.mxu0 0.0
    %449 = vmatpush.msra.mxu0 0.0
    %450 = vmatpush.msra.mxu0 0.0
    %451 = vmatpush.msra.mxu0 0.0
    %452 = vmatpush.msra.mxu0 0.0
    %453 = vmatpush.msra.mxu0 0.0
    %454 = vmatpush.msra.mxu0 %v405
    %455 = vmatmul.f32.gmra.mxu0 %v411
    %v456 = vpop.f32.mrf.mxu0
    %v457 = vadd.f32 0.0, %v456
    %458 = vmatmul.f32.gmra.mxu0 %v414
    %v459 = vpop.f32.mrf.mxu0
    %v460 = vadd.f32 0.0, %v459
    %461 = vdwg.mxu0
    %462 = vmatpush.msra.mxu0 0.0
    %463 = vmatpush.msra.mxu0 0.0
    %464 = vmatpush.msra.mxu0 0.0
    %465 = vmatpush.msra.mxu0 0.0
    %466 = vmatpush.msra.mxu0 0.0
    %467 = vmatpush.msra.mxu0 0.0
    %468 = vmatpush.msra.mxu0 0.0
    %469 = vmatpush.msra.mxu0 0.0
    %470 = vmatpush.msra.mxu0 0.0
    %471 = vmatpush.msra.mxu0 0.0
    %472 = vmatpush.msra.mxu0 0.0
    %473 = vmatpush.msra.mxu0 0.0
    %474 = vmatpush.msra.mxu0 0.0
    %475 = vmatpush.msra.mxu0 0.0
    %476 = vmatpush.msra.mxu0 0.0
    %477 = vmatpush.msra.mxu0 %v406
    %478 = vmatmul.f32.gmra.mxu0 %v411
    %v479 = vpop.f32.mrf.mxu0
    %v480 = vadd.f32 0.0, %v479
    %481 = vmatmul.f32.gmra.mxu0 %v414
    %v482 = vpop.f32.mrf.mxu0
    %v483 = vadd.f32 0.0, %v482
    %484 = vdwg.mxu0
    %v485 = vadd.f32 %v386, %v434
    %v486 = vadd.f32 %v387, %v457
    %v487 = vadd.f32 %v388, %v480
    %v488 = vadd.f32 %v389, %v437
    %v489 = vadd.f32 %v390, %v460
    %v490 = vadd.f32 %v391, %v483
    %s491 = scalar_lea.vmem %s1, 80
    %v492 = vld [vmem:[%s491] sm:$0xff]
    %v493 = vld [vmem:[%s491 + $0x8] sm:$0xff]
    %494 = vrot.lane.b32.xlu0 %v20, 108
    %v495 = vpop.permute.xlu0 %494
    %496 = vrot.lane.b32.xlu0 %v21, 108
    %v497 = vpop.permute.xlu0 %496
    %498 = vrot.lane.b32.xlu0 %v22, 108
    %v499 = vpop.permute.xlu0 %498
    %500 = vrot.lane.b32.xlu0 %v23, 108
    %v501 = vpop.permute.xlu0 %500
    %vm502 = vcmask 883712
    %v503 = vsel %vm502, %v495, %v497
    %v504 = vsel %vm502, %v497, %v499
    %v505 = vsel %vm502, %v499, %v501
    %v510 = vsel %vm43, %v492, 0
    %v513 = vsel %vm43, %v493, 0
    %515 = vmatpush.msra.mxu0 0.0
    %516 = vmatpush.msra.mxu0 0.0
    %517 = vmatpush.msra.mxu0 0.0
    %518 = vmatpush.msra.mxu0 0.0
    %519 = vmatpush.msra.mxu0 0.0
    %520 = vmatpush.msra.mxu0 0.0
    %521 = vmatpush.msra.mxu0 0.0
    %522 = vmatpush.msra.mxu0 0.0
    %523 = vmatpush.msra.mxu0 0.0
    %524 = vmatpush.msra.mxu0 0.0
    %525 = vmatpush.msra.mxu0 0.0
    %526 = vmatpush.msra.mxu0 0.0
    %527 = vmatpush.msra.mxu0 0.0
    %528 = vmatpush.msra.mxu0 0.0
    %529 = vmatpush.msra.mxu0 0.0
    %530 = vmatpush.msra.mxu0 %v503
    %531 = vmatmul.f32.gmra.mxu0 %v510
    %v532 = vpop.f32.mrf.mxu0
    %v533 = vadd.f32 0.0, %v532
    %534 = vmatmul.f32.gmra.mxu0 %v513
    %v535 = vpop.f32.mrf.mxu0
    %v536 = vadd.f32 0.0, %v535
    %537 = vdwg.mxu0
    %538 = vmatpush.msra.mxu0 0.0
    %539 = vmatpush.msra.mxu0 0.0
    %540 = vmatpush.msra.mxu0 0.0
    %541 = vmatpush.msra.mxu0 0.0
    %542 = vmatpush.msra.mxu0 0.0
    %543 = vmatpush.msra.mxu0 0.0
    %544 = vmatpush.msra.mxu0 0.0
    %545 = vmatpush.msra.mxu0 0.0
    %546 = vmatpush.msra.mxu0 0.0
    %547 = vmatpush.msra.mxu0 0.0
    %548 = vmatpush.msra.mxu0 0.0
    %549 = vmatpush.msra.mxu0 0.0
    %550 = vmatpush.msra.mxu0 0.0
    %551 = vmatpush.msra.mxu0 0.0
    %552 = vmatpush.msra.mxu0 0.0
    %553 = vmatpush.msra.mxu0 %v504
    %554 = vmatmul.f32.gmra.mxu0 %v510
    %v555 = vpop.f32.mrf.mxu0
    %v556 = vadd.f32 0.0, %v555
    %557 = vmatmul.f32.gmra.mxu0 %v513
    %v558 = vpop.f32.mrf.mxu0
    %v559 = vadd.f32 0.0, %v558
    %560 = vdwg.mxu0
    %561 = vmatpush.msra.mxu0 0.0
    %562 = vmatpush.msra.mxu0 0.0
    %563 = vmatpush.msra.mxu0 0.0
    %564 = vmatpush.msra.mxu0 0.0
    %565 = vmatpush.msra.mxu0 0.0
    %566 = vmatpush.msra.mxu0 0.0
    %567 = vmatpush.msra.mxu0 0.0
    %568 = vmatpush.msra.mxu0 0.0
    %569 = vmatpush.msra.mxu0 0.0
    %570 = vmatpush.msra.mxu0 0.0
    %571 = vmatpush.msra.mxu0 0.0
    %572 = vmatpush.msra.mxu0 0.0
    %573 = vmatpush.msra.mxu0 0.0
    %574 = vmatpush.msra.mxu0 0.0
    %575 = vmatpush.msra.mxu0 0.0
    %576 = vmatpush.msra.mxu0 %v505
    %577 = vmatmul.f32.gmra.mxu0 %v510
    %v578 = vpop.f32.mrf.mxu0
    %v579 = vadd.f32 0.0, %v578
    %580 = vmatmul.f32.gmra.mxu0 %v513
    %v581 = vpop.f32.mrf.mxu0
    %v582 = vadd.f32 0.0, %v581
    %583 = vdwg.mxu0
    %v584 = vadd.f32 %v485, %v533
    %v585 = vadd.f32 %v486, %v556
    %v586 = vadd.f32 %v487, %v579
    %v587 = vadd.f32 %v488, %v536
    %v588 = vadd.f32 %v489, %v559
    %v589 = vadd.f32 %v490, %v582
    %s590 = scalar_lea.vmem %s1, 96
    %v591 = vld [vmem:[%s590] sm:$0xff]
    %v592 = vld [vmem:[%s590 + $0x8] sm:$0xff]
    %593 = vrot.lane.b32.xlu0 %v20, 92
    %v594 = vpop.permute.xlu0 %593
    %595 = vrot.lane.b32.xlu0 %v21, 92
    %v596 = vpop.permute.xlu0 %595
    %597 = vrot.lane.b32.xlu0 %v22, 92
    %v598 = vpop.permute.xlu0 %597
    %599 = vrot.lane.b32.xlu0 %v23, 92
    %v600 = vpop.permute.xlu0 %599
    %vm601 = vcmask 752640
    %v602 = vsel %vm601, %v594, %v596
    %v603 = vsel %vm601, %v596, %v598
    %v604 = vsel %vm601, %v598, %v600
    %v609 = vsel %vm43, %v591, 0
    %v612 = vsel %vm43, %v592, 0
    %614 = vmatpush.msra.mxu0 0.0
    %615 = vmatpush.msra.mxu0 0.0
    %616 = vmatpush.msra.mxu0 0.0
    %617 = vmatpush.msra.mxu0 0.0
    %618 = vmatpush.msra.mxu0 0.0
    %619 = vmatpush.msra.mxu0 0.0
    %620 = vmatpush.msra.mxu0 0.0
    %621 = vmatpush.msra.mxu0 0.0
    %622 = vmatpush.msra.mxu0 0.0
    %623 = vmatpush.msra.mxu0 0.0
    %624 = vmatpush.msra.mxu0 0.0
    %625 = vmatpush.msra.mxu0 0.0
    %626 = vmatpush.msra.mxu0 0.0
    %627 = vmatpush.msra.mxu0 0.0
    %628 = vmatpush.msra.mxu0 0.0
    %629 = vmatpush.msra.mxu0 %v602
    %630 = vmatmul.f32.gmra.mxu0 %v609
    %v631 = vpop.f32.mrf.mxu0
    %v632 = vadd.f32 0.0, %v631
    %633 = vmatmul.f32.gmra.mxu0 %v612
    %v634 = vpop.f32.mrf.mxu0
    %v635 = vadd.f32 0.0, %v634
    %636 = vdwg.mxu0
    %637 = vmatpush.msra.mxu0 0.0
    %638 = vmatpush.msra.mxu0 0.0
    %639 = vmatpush.msra.mxu0 0.0
    %640 = vmatpush.msra.mxu0 0.0
    %641 = vmatpush.msra.mxu0 0.0
    %642 = vmatpush.msra.mxu0 0.0
    %643 = vmatpush.msra.mxu0 0.0
    %644 = vmatpush.msra.mxu0 0.0
    %645 = vmatpush.msra.mxu0 0.0
    %646 = vmatpush.msra.mxu0 0.0
    %647 = vmatpush.msra.mxu0 0.0
    %648 = vmatpush.msra.mxu0 0.0
    %649 = vmatpush.msra.mxu0 0.0
    %650 = vmatpush.msra.mxu0 0.0
    %651 = vmatpush.msra.mxu0 0.0
    %652 = vmatpush.msra.mxu0 %v603
    %653 = vmatmul.f32.gmra.mxu0 %v609
    %v654 = vpop.f32.mrf.mxu0
    %v655 = vadd.f32 0.0, %v654
    %656 = vmatmul.f32.gmra.mxu0 %v612
    %v657 = vpop.f32.mrf.mxu0
    %v658 = vadd.f32 0.0, %v657
    %659 = vdwg.mxu0
    %660 = vmatpush.msra.mxu0 0.0
    %661 = vmatpush.msra.mxu0 0.0
    %662 = vmatpush.msra.mxu0 0.0
    %663 = vmatpush.msra.mxu0 0.0
    %664 = vmatpush.msra.mxu0 0.0
    %665 = vmatpush.msra.mxu0 0.0
    %666 = vmatpush.msra.mxu0 0.0
    %667 = vmatpush.msra.mxu0 0.0
    %668 = vmatpush.msra.mxu0 0.0
    %669 = vmatpush.msra.mxu0 0.0
    %670 = vmatpush.msra.mxu0 0.0
    %671 = vmatpush.msra.mxu0 0.0
    %672 = vmatpush.msra.mxu0 0.0
    %673 = vmatpush.msra.mxu0 0.0
    %674 = vmatpush.msra.mxu0 0.0
    %675 = vmatpush.msra.mxu0 %v604
    %676 = vmatmul.f32.gmra.mxu0 %v609
    %v677 = vpop.f32.mrf.mxu0
    %v678 = vadd.f32 0.0, %v677
    %679 = vmatmul.f32.gmra.mxu0 %v612
    %v680 = vpop.f32.mrf.mxu0
    %v681 = vadd.f32 0.0, %v680
    %682 = vdwg.mxu0
    %v683 = vadd.f32 %v584, %v632
    %v684 = vadd.f32 %v585, %v655
    %v685 = vadd.f32 %v586, %v678
    %v686 = vadd.f32 %v587, %v635
    %v687 = vadd.f32 %v588, %v658
    %v688 = vadd.f32 %v589, %v681
    %s689 = scalar_lea.vmem %s1, 112
    %v690 = vld [vmem:[%s689] sm:$0xff]
    %v691 = vld [vmem:[%s689 + $0x8] sm:$0xff]
    %692 = vrot.lane.b32.xlu0 %v20, 91
    %v693 = vpop.permute.xlu0 %692
    %694 = vrot.lane.b32.xlu0 %v21, 91
    %v695 = vpop.permute.xlu0 %694
    %696 = vrot.lane.b32.xlu0 %v22, 91
    %v697 = vpop.permute.xlu0 %696
    %698 = vrot.lane.b32.xlu0 %v23, 91
    %v699 = vpop.permute.xlu0 %698
    %vm700 = vcmask 744448
    %v701 = vsel %vm700, %v693, %v695
    %v702 = vsel %vm700, %v695, %v697
    %v703 = vsel %vm700, %v697, %v699
    %v708 = vsel %vm43, %v690, 0
    %v711 = vsel %vm43, %v691, 0
    %713 = vmatpush.msra.mxu0 0.0
    %714 = vmatpush.msra.mxu0 0.0
    %715 = vmatpush.msra.mxu0 0.0
    %716 = vmatpush.msra.mxu0 0.0
    %717 = vmatpush.msra.mxu0 0.0
    %718 = vmatpush.msra.mxu0 0.0
    %719 = vmatpush.msra.mxu0 0.0
    %720 = vmatpush.msra.mxu0 0.0
    %721 = vmatpush.msra.mxu0 0.0
    %722 = vmatpush.msra.mxu0 0.0
    %723 = vmatpush.msra.mxu0 0.0
    %724 = vmatpush.msra.mxu0 0.0
    %725 = vmatpush.msra.mxu0 0.0
    %726 = vmatpush.msra.mxu0 0.0
    %727 = vmatpush.msra.mxu0 0.0
    %728 = vmatpush.msra.mxu0 %v701
    %729 = vmatmul.f32.gmra.mxu0 %v708
    %v730 = vpop.f32.mrf.mxu0
    %v731 = vadd.f32 0.0, %v730
    %732 = vmatmul.f32.gmra.mxu0 %v711
    %v733 = vpop.f32.mrf.mxu0
    %v734 = vadd.f32 0.0, %v733
    %735 = vdwg.mxu0
    %736 = vmatpush.msra.mxu0 0.0
    %737 = vmatpush.msra.mxu0 0.0
    %738 = vmatpush.msra.mxu0 0.0
    %739 = vmatpush.msra.mxu0 0.0
    %740 = vmatpush.msra.mxu0 0.0
    %741 = vmatpush.msra.mxu0 0.0
    %742 = vmatpush.msra.mxu0 0.0
    %743 = vmatpush.msra.mxu0 0.0
    %744 = vmatpush.msra.mxu0 0.0
    %745 = vmatpush.msra.mxu0 0.0
    %746 = vmatpush.msra.mxu0 0.0
    %747 = vmatpush.msra.mxu0 0.0
    %748 = vmatpush.msra.mxu0 0.0
    %749 = vmatpush.msra.mxu0 0.0
    %750 = vmatpush.msra.mxu0 0.0
    %751 = vmatpush.msra.mxu0 %v702
    %752 = vmatmul.f32.gmra.mxu0 %v708
    %v753 = vpop.f32.mrf.mxu0
    %v754 = vadd.f32 0.0, %v753
    %755 = vmatmul.f32.gmra.mxu0 %v711
    %v756 = vpop.f32.mrf.mxu0
    %v757 = vadd.f32 0.0, %v756
    %758 = vdwg.mxu0
    %759 = vmatpush.msra.mxu0 0.0
    %760 = vmatpush.msra.mxu0 0.0
    %761 = vmatpush.msra.mxu0 0.0
    %762 = vmatpush.msra.mxu0 0.0
    %763 = vmatpush.msra.mxu0 0.0
    %764 = vmatpush.msra.mxu0 0.0
    %765 = vmatpush.msra.mxu0 0.0
    %766 = vmatpush.msra.mxu0 0.0
    %767 = vmatpush.msra.mxu0 0.0
    %768 = vmatpush.msra.mxu0 0.0
    %769 = vmatpush.msra.mxu0 0.0
    %770 = vmatpush.msra.mxu0 0.0
    %771 = vmatpush.msra.mxu0 0.0
    %772 = vmatpush.msra.mxu0 0.0
    %773 = vmatpush.msra.mxu0 0.0
    %774 = vmatpush.msra.mxu0 %v703
    %775 = vmatmul.f32.gmra.mxu0 %v708
    %v776 = vpop.f32.mrf.mxu0
    %v777 = vadd.f32 0.0, %v776
    %778 = vmatmul.f32.gmra.mxu0 %v711
    %v779 = vpop.f32.mrf.mxu0
    %v780 = vadd.f32 0.0, %v779
    %781 = vdwg.mxu0
    %v782 = vadd.f32 %v683, %v731
    %v783 = vadd.f32 %v684, %v754
    %v784 = vadd.f32 %v685, %v777
    %v785 = vadd.f32 %v686, %v734
    %v786 = vadd.f32 %v687, %v757
    %v787 = vadd.f32 %v688, %v780
    %s788 = scalar_lea.vmem %s1, 128
    %v789 = vld [vmem:[%s788] sm:$0xff]
    %v790 = vld [vmem:[%s788 + $0x8] sm:$0xff]
    %791 = vrot.lane.b32.xlu0 %v20, 90
    %v792 = vpop.permute.xlu0 %791
    %793 = vrot.lane.b32.xlu0 %v21, 90
    %v794 = vpop.permute.xlu0 %793
    %795 = vrot.lane.b32.xlu0 %v22, 90
    %v796 = vpop.permute.xlu0 %795
    %797 = vrot.lane.b32.xlu0 %v23, 90
    %v798 = vpop.permute.xlu0 %797
    %vm799 = vcmask 736256
    %v800 = vsel %vm799, %v792, %v794
    %v801 = vsel %vm799, %v794, %v796
    %v802 = vsel %vm799, %v796, %v798
    %v807 = vsel %vm43, %v789, 0
    %v810 = vsel %vm43, %v790, 0
    %812 = vmatpush.msra.mxu0 0.0
    %813 = vmatpush.msra.mxu0 0.0
    %814 = vmatpush.msra.mxu0 0.0
    %815 = vmatpush.msra.mxu0 0.0
    %816 = vmatpush.msra.mxu0 0.0
    %817 = vmatpush.msra.mxu0 0.0
    %818 = vmatpush.msra.mxu0 0.0
    %819 = vmatpush.msra.mxu0 0.0
    %820 = vmatpush.msra.mxu0 0.0
    %821 = vmatpush.msra.mxu0 0.0
    %822 = vmatpush.msra.mxu0 0.0
    %823 = vmatpush.msra.mxu0 0.0
    %824 = vmatpush.msra.mxu0 0.0
    %825 = vmatpush.msra.mxu0 0.0
    %826 = vmatpush.msra.mxu0 0.0
    %827 = vmatpush.msra.mxu0 %v800
    %828 = vmatmul.f32.gmra.mxu0 %v807
    %v829 = vpop.f32.mrf.mxu0
    %v830 = vadd.f32 0.0, %v829
    %831 = vmatmul.f32.gmra.mxu0 %v810
    %v832 = vpop.f32.mrf.mxu0
    %v833 = vadd.f32 0.0, %v832
    %834 = vdwg.mxu0
    %835 = vmatpush.msra.mxu0 0.0
    %836 = vmatpush.msra.mxu0 0.0
    %837 = vmatpush.msra.mxu0 0.0
    %838 = vmatpush.msra.mxu0 0.0
    %839 = vmatpush.msra.mxu0 0.0
    %840 = vmatpush.msra.mxu0 0.0
    %841 = vmatpush.msra.mxu0 0.0
    %842 = vmatpush.msra.mxu0 0.0
    %843 = vmatpush.msra.mxu0 0.0
    %844 = vmatpush.msra.mxu0 0.0
    %845 = vmatpush.msra.mxu0 0.0
    %846 = vmatpush.msra.mxu0 0.0
    %847 = vmatpush.msra.mxu0 0.0
    %848 = vmatpush.msra.mxu0 0.0
    %849 = vmatpush.msra.mxu0 0.0
    %850 = vmatpush.msra.mxu0 %v801
    %851 = vmatmul.f32.gmra.mxu0 %v807
    %v852 = vpop.f32.mrf.mxu0
    %v853 = vadd.f32 0.0, %v852
    %854 = vmatmul.f32.gmra.mxu0 %v810
    %v855 = vpop.f32.mrf.mxu0
    %v856 = vadd.f32 0.0, %v855
    %857 = vdwg.mxu0
    %858 = vmatpush.msra.mxu0 0.0
    %859 = vmatpush.msra.mxu0 0.0
    %860 = vmatpush.msra.mxu0 0.0
    %861 = vmatpush.msra.mxu0 0.0
    %862 = vmatpush.msra.mxu0 0.0
    %863 = vmatpush.msra.mxu0 0.0
    %864 = vmatpush.msra.mxu0 0.0
    %865 = vmatpush.msra.mxu0 0.0
    %866 = vmatpush.msra.mxu0 0.0
    %867 = vmatpush.msra.mxu0 0.0
    %868 = vmatpush.msra.mxu0 0.0
    %869 = vmatpush.msra.mxu0 0.0
    %870 = vmatpush.msra.mxu0 0.0
    %871 = vmatpush.msra.mxu0 0.0
    %872 = vmatpush.msra.mxu0 0.0
    %873 = vmatpush.msra.mxu0 %v802
    %874 = vmatmul.f32.gmra.mxu0 %v807
    %v875 = vpop.f32.mrf.mxu0
    %v876 = vadd.f32 0.0, %v875
    %877 = vmatmul.f32.gmra.mxu0 %v810
    %v878 = vpop.f32.mrf.mxu0
    %v879 = vadd.f32 0.0, %v878
    %880 = vdwg.mxu0
    %v881 = vadd.f32 %v782, %v830
    %v882 = vadd.f32 %v783, %v853
    %v883 = vadd.f32 %v784, %v876
    %v884 = vadd.f32 %v785, %v833
    %v885 = vadd.f32 %v786, %v856
    %v886 = vadd.f32 %v787, %v879
    %887 = vst [vmem:[#allocation2] sm:$0xff] %v881
    %888 = vst [vmem:[#allocation2 + $0x8] sm:$0xff] %v882
    %889 = vst [vmem:[#allocation2 + $0x10] sm:$0xff] %v883
    %890 = vst [vmem:[#allocation2 + $0x18] sm:$0xff] %v884
    %891 = vst [vmem:[#allocation2 + $0x20] sm:$0xff] %v885
    %892 = vst [vmem:[#allocation2 + $0x28] sm:$0xff] %v886
    // Predicated region
    $region10: #{tpu_custom_call.1} parent=1 // pred_check
      _
    $region11: #{tpu_custom_call.1} parent=1 // pred_check_branch
      %894 = sbr.rel (0) target = $region13
    $region12: #{tpu_custom_call.1} parent=1 // pred_region
      %896 = vsyncadd [#allocation3], 0
      %s897 = sshll.u32 [#allocation2], 4
      %s898 = int_to_ptr.vmem [resolvable:$true] %s897
      %s899 = sshll.u32 %s2, 4
      %s900 = int_to_ptr.hbm [resolvable:$true] %s899
      %905 = dma.vmem_to_hbm [thread:$0]  %s898, 768, %s900, [#allocation3], 384, 384, 24
    $region13: #{tpu_custom_call.1} parent=1 // pred_fallthru
      _
    // Predicated region
    $region14: #{tpu_custom_call.1} parent=1 // pred_check
      _
    $region15: #{tpu_custom_call.1} parent=1 // pred_check_branch
      %907 = sbr.rel (0) target = $region17
    $region16: #{tpu_custom_call.1} parent=1 // pred_region
      %909 = dma.done [#allocation3], 768
    $region17: #{tpu_custom_call.1} parent=1 // pred_fallthru
      _
    %910 = vsyncpa [#allocation3], 1

</llo_original>
